<compile_context>
chip_gen: v7x
topology: tpu7x:2x2x1
jax: 0.10.0
libtpu: 0.0.40
codegen_flags: <defaults>
</compile_context>

<pallas_src>
import jax
import jax.numpy as jnp
from jax import lax
from jax.experimental import pallas as pl
from jax.experimental.pallas import tpu as pltpu

LN_EPS = 1e-5  # torch.nn.LayerNorm default


# ----------------------------------------------------------------------------- kernel
def _gru_ln_seq_kernel(x_ref, h0_ref, wx_ref, wh_ref, wph_ref, g_ref, b_ref,
                       out_ref, h_scratch):
    t = pl.program_id(1)

    # Initialize the VMEM-resident hidden-state carry at the first time step of
    # each batch tile.
    @pl.when(t == 0)
    def _():
        h_scratch[...] = h0_ref[...].astype(jnp.float32)

    h_f32 = h_scratch[...]                       # (B, H) f32 carry
    H = h_f32.shape[-1]
    mxu_dtype = wx_ref.dtype                     # bf16 (or f32) MXU operand dtype

    x = x_ref[0].astype(mxu_dtype)               # (B, I)
    h = h_f32.astype(mxu_dtype)                  # (B, H)

    # Fused matmuls, f32 accumulation on the MXU.
    x3 = jnp.dot(x, wx_ref[...], preferred_element_type=jnp.float32)   # (B, 3H)
    h2 = jnp.dot(h, wh_ref[...], preferred_element_type=jnp.float32)   # (B, 2H)

    g = g_ref[...]                               # (3, H) f32 (packed as f32)
    b = b_ref[...]                               # (3, H) f32, reset_bias pre-folded

    def layer_norm(y, gamma, beta):
        mu = jnp.mean(y, axis=-1, keepdims=True)
        var = jnp.mean((y - mu) * (y - mu), axis=-1, keepdims=True)
        return (y - mu) * lax.rsqrt(var + LN_EPS) * gamma + beta

    # update / reset gates: batch both LayerNorms into one (2, B, H) reduction.
    u_pre = x3[:, :H] + h2[:, :H]
    r_pre = x3[:, H:2 * H] + h2[:, H:]
    ur_pre = jnp.stack([u_pre, r_pre], axis=0)                      # (2, B, H)
    ur = jax.nn.sigmoid(layer_norm(ur_pre, g[0:2, None, :], b[0:2, None, :]))
    update = ur[0]                                                  # (B, H)
    reset = ur[1]                                                   # (B, H)

    # proposal: tanh(LN(x @ Wpx + (reset * h) @ Wph)); data-dependent on reset.
    rh = (reset * h_f32).astype(mxu_dtype)
    p_pre = x3[:, 2 * H:] + jnp.dot(rh, wph_ref[...],
                                    preferred_element_type=jnp.float32)
    h_n = jnp.tanh(layer_norm(p_pre, g[2], b[2]))

    # (1 - update) * h_n + update * h  ==  h_n + update * (h - h_n)
    h_new = h_n + update * (h_f32 - h_n)

    h_scratch[...] = h_new
    out_ref[0] = h_new.astype(out_ref.dtype)


# ------------------------------------------------------------------------ param prep
def prepare_params(params, input_size, *, reset_bias=1.0, mxu_dtype=jnp.bfloat16):
    """One-time packing of torch-convention params into kernel-ready operands.

    Torch Linear weight is (H, I+H); split/transpose so the kernel does x @ W and
    fuse the gates so only 3 matmuls are issued per step:
        Wx  = [Wux | Wrx | Wpx]  (I, 3H)
        Wh  = [Wuh | Wrh]        (H, 2H)
        Wph                      (H, H)   (stays separate: depends on reset*h)
    reset_bias is folded into the reset-gate LayerNorm beta (row 1 of `b`).
    """
    def split_w(w):                       # (H, I+H) -> (I, H), (H, H)
        wt = w.T
        return wt[:input_size, :], wt[input_size:, :]

    wux, wuh = split_w(params["update_w"])
    wrx, wrh = split_w(params["reset_w"])
    wpx, wph = split_w(params["proposal_w"])

    return {
        "wx": jnp.concatenate([wux, wrx, wpx], axis=1).astype(mxu_dtype),   # (I, 3H)
        "wh": jnp.concatenate([wuh, wrh], axis=1).astype(mxu_dtype),        # (H, 2H)
        "wph": wph.astype(mxu_dtype),                                       # (H, H)
        "g": jnp.stack([params["update_g"], params["reset_g"],
                        params["proposal_g"]], axis=0).astype(jnp.float32), # (3, H)
        "b": jnp.stack([params["update_b"],
                        params["reset_b"] + jnp.float32(reset_bias),
                        params["proposal_b"]], axis=0).astype(jnp.float32), # (3, H)
    }


# -------------------------------------------------------------------------- wrappers
def gru_cell_layer_norm_seq(xs, h0, packed, *, batch_block=None):
    """Run the GRU-LN cell over a whole sequence inside ONE pallas_call.

    xs: (T, B, input_size), h0: (B, hidden_size) -> (T, B, hidden_size) (all h_t).
    """
    T, B, I = xs.shape
    _, H = h0.shape
    bb = B if batch_block is None else batch_block
    assert B % bb == 0 and (bb == B or bb % 8 == 0), "batch tile must be 8-aligned"
    nb = B // bb

    wx, wh, wph, g, b = (packed[k] for k in ("wx", "wh", "wph", "g", "b"))

    flops = 2 * T * B * (I * 3 * H + 2 * H * H + H * H) + 12 * T * B * H
    transcendentals = 4 * T * B * H
    bytes_accessed = int(
        xs.size * xs.dtype.itemsize + T * B * H * xs.dtype.itemsize
        + h0.size * h0.dtype.itemsize
        + sum(int(packed[k].size) * packed[k].dtype.itemsize
              for k in ("wx", "wh", "wph", "g", "b")))

    grid_spec = pltpu.PrefetchScalarGridSpec(
        num_scalar_prefetch=0,
        grid=(nb, T),
        in_specs=[
            # x: one time step per grid point, streamed/double-buffered by Pallas.
            pl.BlockSpec((1, bb, I), lambda ib, t: (t, ib, 0)),
            # h0: one fetch per batch tile (constant over t).
            pl.BlockSpec((bb, H), lambda ib, t: (ib, 0)),
            # Weights / LN params: constant index_map -> VMEM-resident, no re-DMA.
            pl.BlockSpec((I, 3 * H), lambda ib, t: (0, 0)),
            pl.BlockSpec((H, 2 * H), lambda ib, t: (0, 0)),
            pl.BlockSpec((H, H), lambda ib, t: (0, 0)),
            pl.BlockSpec((3, H), lambda ib, t: (0, 0)),
            pl.BlockSpec((3, H), lambda ib, t: (0, 0)),
        ],
        out_specs=pl.BlockSpec((1, bb, H), lambda ib, t: (t, ib, 0)),
        scratch_shapes=[pltpu.VMEM((bb, H), jnp.float32)],   # hidden-state carry
    )

    return pl.pallas_call(
        _gru_ln_seq_kernel,
        out_shape=jax.ShapeDtypeStruct((T, B, H), xs.dtype),
        grid_spec=grid_spec,
        compiler_params=pltpu.CompilerParams(
            # batch tiles independent (v7x megacore); time is a sequential carry.
            dimension_semantics=("parallel", "arbitrary")),
        cost_estimate=pl.CostEstimate(flops=flops,
                                      transcendentals=transcendentals,
                                      bytes_accessed=bytes_accessed),
    )(xs, h0, wx, wh, wph, g, b)


def gru_cell_layer_norm(inputs, state, packed):
    """Single-step forward matching GRUCellLayerNorm.forward(inputs, state)."""
    return gru_cell_layer_norm_seq(inputs[None], state, packed)[0]


# ------------------------------------------------------------------------- reference
def _reference(inputs, state, params, reset_bias=1.0):
    """Pure-JAX reference mirroring the PyTorch forward exactly (f32-accurate dots)."""
    hp = lax.Precision.HIGHEST

    def ln(y, g, b):
        mu = jnp.mean(y, axis=-1, keepdims=True)
        var = jnp.mean((y - mu) ** 2, axis=-1, keepdims=True)
        return (y - mu) / jnp.sqrt(var + LN_EPS) * g + b

    cat = jnp.concatenate([inputs, state], axis=-1)
    update = jax.nn.sigmoid(ln(jnp.dot(cat, params["update_w"].T, precision=hp),
                               params["update_g"], params["update_b"]))
    reset = jax.nn.sigmoid(ln(jnp.dot(cat, params["reset_w"].T, precision=hp),
                              params["reset_g"], params["reset_b"]) + reset_bias)
    cat2 = jnp.concatenate([inputs, reset * state], axis=-1)
    h_n = jnp.tanh(ln(jnp.dot(cat2, params["proposal_w"].T, precision=hp),
                      params["proposal_g"], params["proposal_b"]))
    return (1.0 - update) * h_n + update * state


def _reference_seq(xs, h0, params, reset_bias=1.0):
    h = h0
    outs = []
    for t in range(xs.shape[0]):
        h = _reference(xs[t], h, params, reset_bias)
        outs.append(h)
    return jnp.stack(outs, axis=0)


# ------------------------------------------------------------------------------ main
if __name__ == "__main__":
    T, B, INPUT_SIZE, HIDDEN_SIZE = 8, 8, 32, 32
    RESET_BIAS = 1.0

    key = jax.random.PRNGKey(0)
    keys = jax.random.split(key, 8)

    # Deterministic synthetic parameters (torch nn.Linear weight shape: (H, I+H)).
    scale = 1.0 / jnp.sqrt(INPUT_SIZE + HIDDEN_SIZE)
    params = {
        "update_w": jax.random.uniform(keys[0], (HIDDEN_SIZE, INPUT_SIZE + HIDDEN_SIZE),
                                       jnp.float32, -scale, scale),
        "reset_w": jax.random.uniform(keys[1], (HIDDEN_SIZE, INPUT_SIZE + HIDDEN_SIZE),
                                      jnp.float32, -scale, scale),
        "proposal_w": jax.random.uniform(keys[2], (HIDDEN_SIZE, INPUT_SIZE + HIDDEN_SIZE),
                                         jnp.float32, -scale, scale),
        # LayerNorm init: weight=1, bias=0 (perturb slightly to exercise affine path).
        "update_g": jnp.ones((HIDDEN_SIZE,), jnp.float32)
                    + 0.01 * jax.random.normal(keys[3], (HIDDEN_SIZE,)),
        "update_b": 0.01 * jax.random.normal(keys[4], (HIDDEN_SIZE,)),
        "reset_g": jnp.ones((HIDDEN_SIZE,), jnp.float32),
        "reset_b": jnp.zeros((HIDDEN_SIZE,), jnp.float32),
        "proposal_g": jnp.ones((HIDDEN_SIZE,), jnp.float32),
        "proposal_b": jnp.zeros((HIDDEN_SIZE,), jnp.float32),
    }

    xs = jax.random.normal(keys[5], (T, B, INPUT_SIZE), jnp.float32)
    h0 = jax.random.normal(keys[6], (B, HIDDEN_SIZE), jnp.float32)

    ref_step = _reference(xs[0], h0, params, RESET_BIAS)
    ref_seq = _reference_seq(xs, h0, params, RESET_BIAS)

    # --- exact-dtype (f32 MXU operands) path: tight correctness check ------------
    packed_f32 = prepare_params(params, INPUT_SIZE,
                                reset_bias=RESET_BIAS, mxu_dtype=jnp.float32)

    out_step = jax.block_until_ready(gru_cell_layer_norm(xs[0], h0, packed_f32))
    assert out_step.shape == (B, HIDDEN_SIZE)
    err = float(jnp.max(jnp.abs(out_step - ref_step)))
    assert jnp.allclose(out_step, ref_step, atol=1e-3, rtol=1e-3), \
        f"f32 single-step mismatch, max abs err {err}"

    out_seq = jax.block_until_ready(gru_cell_layer_norm_seq(xs, h0, packed_f32))
    assert out_seq.shape == (T, B, HIDDEN_SIZE)
    err = float(jnp.max(jnp.abs(out_seq - ref_seq)))
    assert jnp.allclose(out_seq, ref_seq, atol=1e-3, rtol=1e-3), \
        f"f32 sequence mismatch, max abs err {err}"

    # --- production path: bf16 MXU operands, f32 accumulate ----------------------
    packed_bf16 = prepare_params(params, INPUT_SIZE, reset_bias=RESET_BIAS)
    out_bf16 = jax.block_until_ready(gru_cell_layer_norm_seq(xs, h0, packed_bf16))
    err = float(jnp.max(jnp.abs(out_bf16 - ref_seq)))
    assert jnp.allclose(out_bf16, ref_seq, atol=6e-2, rtol=6e-2), \
        f"bf16 sequence mismatch, max abs err {err}"

    print("KERNEL_OK")
</pallas_src>

<mosaic_0001>
module attributes {stable_mosaic.version = 11 : i64} {
  func.func @_gru_ln_seq_kernel(%arg0: i32, %arg1: i32, %arg2: memref<1x8x32xf32, #tpu.memory_space<vmem>>, %arg3: memref<8x32xf32, #tpu.memory_space<vmem>>, %arg4: memref<32x96xf32, #tpu.memory_space<vmem>>, %arg5: memref<32x64xf32, #tpu.memory_space<vmem>>, %arg6: memref<32x32xf32, #tpu.memory_space<vmem>>, %arg7: memref<3x32xf32, #tpu.memory_space<vmem>>, %arg8: memref<3x32xf32, #tpu.memory_space<vmem>>, %arg9: memref<1x8x32xf32, #tpu.memory_space<vmem>>, %arg10: memref<8x32xf32, #tpu.memory_space<vmem>>) attributes {dimension_semantics = [#tpu.dimension_semantics<parallel>, #tpu.dimension_semantics<arbitrary>], iteration_bounds = array<i64: 1, 1>, scalar_prefetch = 0 : i64, scratch_operands = 1 : i64, tpu.core_type = #tpu.core_type<tc>, window_params = [{transform_indices = @transform_0, window_bounds = array<i64: 1, 8, 32>}, {transform_indices = @transform_1, window_bounds = array<i64: 8, 32>}, {pipeline_mode = #tpu.pipeline_mode<synchronous>, transform_indices = @transform_2, window_bounds = array<i64: 32, 96>}, {pipeline_mode = #tpu.pipeline_mode<synchronous>, transform_indices = @transform_3, window_bounds = array<i64: 32, 64>}, {pipeline_mode = #tpu.pipeline_mode<synchronous>, transform_indices = @transform_4, window_bounds = array<i64: 32, 32>}, {pipeline_mode = #tpu.pipeline_mode<synchronous>, transform_indices = @transform_5, window_bounds = array<i64: 3, 32>}, {pipeline_mode = #tpu.pipeline_mode<synchronous>, transform_indices = @transform_6, window_bounds = array<i64: 3, 32>}, {transform_indices = @transform_7, window_bounds = array<i64: 1, 8, 32>}]} {
    %c0_i32 = arith.constant 0 : i32
    %0 = arith.cmpi eq, %arg1, %c0_i32 : i32
    %1 = arith.extui %0 : i1 to i32
    %c0_i32_0 = arith.constant 0 : i32
    %2 = arith.cmpi ne, %1, %c0_i32_0 : i32
    scf.if %2 {
      %c0_33 = arith.constant 0 : index
      %c0_34 = arith.constant 0 : index
      %101 = vector.load %arg3[%c0_33, %c0_34] : memref<8x32xf32, #tpu.memory_space<vmem>>, vector<8x32xf32>
      %c0_35 = arith.constant 0 : index
      %c0_36 = arith.constant 0 : index
      %102 = vector.load %arg10[%c0_35, %c0_36] : memref<8x32xf32, #tpu.memory_space<vmem>>, vector<8x32xf32>
      tpu.vector_store %arg10[%c0_35, %c0_36], %101 {strides = array<i32>} : memref<8x32xf32, #tpu.memory_space<vmem>>, vector<8x32xf32>,
    } else {
    }
    %c0 = arith.constant 0 : index
    %c0_1 = arith.constant 0 : index
    %3 = vector.load %arg10[%c0, %c0_1] : memref<8x32xf32, #tpu.memory_space<vmem>>, vector<8x32xf32>
    %c0_2 = arith.constant 0 : index
    %c0_3 = arith.constant 0 : index
    %c0_4 = arith.constant 0 : index
    %4 = vector.load %arg2[%c0_2, %c0_3, %c0_4] : memref<1x8x32xf32, #tpu.memory_space<vmem>>, vector<1x8x32xf32>
    %5 = vector.shape_cast %4 : vector<1x8x32xf32> to vector<8x32xf32>
    %c0_5 = arith.constant 0 : index
    %c0_6 = arith.constant 0 : index
    %6 = vector.load %arg4[%c0_5, %c0_6] : memref<32x96xf32, #tpu.memory_space<vmem>>, vector<32x96xf32>
    %cst = arith.constant dense<0.000000e+00> : vector<8x96xf32>
    %7 = tpu.matmul %5, %6, %cst {dimension_numbers = #tpu.dot_dimension_numbers<[1], [0], [0], [1], [0, 0, 1, 1], [], []>} : vector<8x32xf32>, vector<32x96xf32>, vector<8x96xf32> -> vector<8x96xf32>
    %c0_7 = arith.constant 0 : index
    %c0_8 = arith.constant 0 : index
    %8 = vector.load %arg5[%c0_7, %c0_8] : memref<32x64xf32, #tpu.memory_space<vmem>>, vector<32x64xf32>
    %cst_9 = arith.constant dense<0.000000e+00> : vector<8x64xf32>
    %9 = tpu.matmul %3, %8, %cst_9 {dimension_numbers = #tpu.dot_dimension_numbers<[1], [0], [0], [1], [0, 0, 1, 1], [], []>} : vector<8x32xf32>, vector<32x64xf32>, vector<8x64xf32> -> vector<8x64xf32>
    %c0_10 = arith.constant 0 : index
    %c0_11 = arith.constant 0 : index
    %10 = vector.load %arg7[%c0_10, %c0_11] : memref<3x32xf32, #tpu.memory_space<vmem>>, vector<3x32xf32>
    %c0_12 = arith.constant 0 : index
    %c0_13 = arith.constant 0 : index
    %11 = vector.load %arg8[%c0_12, %c0_13] : memref<3x32xf32, #tpu.memory_space<vmem>>, vector<3x32xf32>
    %12 = vector.extract_strided_slice %7 {offsets = [0, 0], sizes = [8, 32], strides = [1, 1]} : vector<8x96xf32> to vector<8x32xf32>
    %13 = vector.extract_strided_slice %9 {offsets = [0, 0], sizes = [8, 32], strides = [1, 1]} : vector<8x64xf32> to vector<8x32xf32>
    %14 = arith.addf %12, %13 : vector<8x32xf32>
    %15 = vector.extract_strided_slice %7 {offsets = [0, 32], sizes = [8, 32], strides = [1, 1]} : vector<8x96xf32> to vector<8x32xf32>
    %16 = vector.extract_strided_slice %9 {offsets = [0, 32], sizes = [8, 32], strides = [1, 1]} : vector<8x64xf32> to vector<8x32xf32>
    %17 = arith.addf %15, %16 : vector<8x32xf32>
    %18 = vector.shape_cast %14 : vector<8x32xf32> to vector<1x8x32xf32>
    %19 = vector.shape_cast %17 : vector<8x32xf32> to vector<1x8x32xf32>
    %20 = tpu.concatenate %18, %19 in 0 : vector<1x8x32xf32>, vector<1x8x32xf32> -> vector<2x8x32xf32>
    %21 = vector.extract_strided_slice %10 {offsets = [0, 0], sizes = [2, 32], strides = [1, 1]} : vector<3x32xf32> to vector<2x32xf32>
    %22 = vector.shape_cast %21 : vector<2x32xf32> to vector<2x1x32xf32>
    %23 = vector.extract_strided_slice %11 {offsets = [0, 0], sizes = [2, 32], strides = [1, 1]} : vector<3x32xf32> to vector<2x32xf32>
    %24 = vector.shape_cast %23 : vector<2x32xf32> to vector<2x1x32xf32>
    %cst_14 = arith.constant dense<0.000000e+00> : vector<2x8xf32>
    %25 = vector.multi_reduction <add>, %20, %cst_14 [2] : vector<2x8x32xf32> to vector<2x8xf32>
    %26 = vector.shape_cast %25 : vector<2x8xf32> to vector<2x8x1xf32>
    %cst_15 = arith.constant 3.200000e+01 : f32
    %27 = vector.broadcast %cst_15 : f32 to vector<2x8x1xf32>
    %28 = arith.divf %26, %27 : vector<2x8x1xf32>
    %29 = vector.broadcast %28 : vector<2x8x1xf32> to vector<2x8x32xf32>
    %30 = arith.subf %20, %29 : vector<2x8x32xf32>
    %31 = vector.broadcast %28 : vector<2x8x1xf32> to vector<2x8x32xf32>
    %32 = arith.subf %20, %31 : vector<2x8x32xf32>
    %33 = arith.mulf %30, %32 : vector<2x8x32xf32>
    %cst_16 = arith.constant dense<0.000000e+00> : vector<2x8xf32>
    %34 = vector.multi_reduction <add>, %33, %cst_16 [2] : vector<2x8x32xf32> to vector<2x8xf32>
    %35 = vector.shape_cast %34 : vector<2x8xf32> to vector<2x8x1xf32>
    %cst_17 = arith.constant 3.200000e+01 : f32
    %36 = vector.broadcast %cst_17 : f32 to vector<2x8x1xf32>
    %37 = arith.divf %35, %36 : vector<2x8x1xf32>
    %38 = vector.broadcast %28 : vector<2x8x1xf32> to vector<2x8x32xf32>
    %39 = arith.subf %20, %38 : vector<2x8x32xf32>
    %cst_18 = arith.constant 9.99999974E-6 : f32
    %40 = vector.broadcast %cst_18 : f32 to vector<2x8x1xf32>
    %41 = arith.addf %37, %40 : vector<2x8x1xf32>
    %42 = math.rsqrt %41 : vector<2x8x1xf32>
    %43 = vector.broadcast %42 : vector<2x8x1xf32> to vector<2x8x32xf32>
    %44 = arith.mulf %39, %43 : vector<2x8x32xf32>
    %45 = vector.broadcast %22 : vector<2x1x32xf32> to vector<2x8x32xf32>
    %46 = arith.mulf %44, %45 : vector<2x8x32xf32>
    %47 = vector.broadcast %24 : vector<2x1x32xf32> to vector<2x8x32xf32>
    %48 = arith.addf %46, %47 : vector<2x8x32xf32>
    %49 = arith.negf %48 : vector<2x8x32xf32>
    %50 = math.exp %49 : vector<2x8x32xf32>
    %cst_19 = arith.constant 1.000000e+00 : f32
    %51 = vector.broadcast %cst_19 : f32 to vector<2x8x32xf32>
    %52 = arith.addf %51, %50 : vector<2x8x32xf32>
    %53 = arith.divf %51, %52 : vector<2x8x32xf32>
    %54 = vector.extract_strided_slice %53 {offsets = [0, 0, 0], sizes = [1, 8, 32], strides = [1, 1, 1]} : vector<2x8x32xf32> to vector<1x8x32xf32>
    %55 = vector.shape_cast %54 : vector<1x8x32xf32> to vector<8x32xf32>
    %56 = vector.extract_strided_slice %53 {offsets = [1, 0, 0], sizes = [1, 8, 32], strides = [1, 1, 1]} : vector<2x8x32xf32> to vector<1x8x32xf32>
    %57 = vector.shape_cast %56 : vector<1x8x32xf32> to vector<8x32xf32>
    %58 = arith.mulf %57, %3 : vector<8x32xf32>
    %59 = vector.extract_strided_slice %7 {offsets = [0, 64], sizes = [8, 32], strides = [1, 1]} : vector<8x96xf32> to vector<8x32xf32>
    %c0_20 = arith.constant 0 : index
    %c0_21 = arith.constant 0 : index
    %60 = vector.load %arg6[%c0_20, %c0_21] : memref<32x32xf32, #tpu.memory_space<vmem>>, vector<32x32xf32>
    %cst_22 = arith.constant dense<0.000000e+00> : vector<8x32xf32>
    %61 = tpu.matmul %58, %60, %cst_22 {dimension_numbers = #tpu.dot_dimension_numbers<[1], [0], [0], [1], [0, 0, 1, 1], [], []>} : vector<8x32xf32>, vector<32x32xf32>, vector<8x32xf32> -> vector<8x32xf32>
    %62 = arith.addf %59, %61 : vector<8x32xf32>
    %63 = vector.extract_strided_slice %10 {offsets = [2, 0], sizes = [1, 32], strides = [1, 1]} : vector<3x32xf32> to vector<1x32xf32>
    %64 = vector.shape_cast %63 : vector<1x32xf32> to vector<32xf32>
    %65 = vector.extract_strided_slice %11 {offsets = [2, 0], sizes = [1, 32], strides = [1, 1]} : vector<3x32xf32> to vector<1x32xf32>
    %66 = vector.shape_cast %65 : vector<1x32xf32> to vector<32xf32>
    %cst_23 = arith.constant dense<0.000000e+00> : vector<8xf32>
    %67 = vector.multi_reduction <add>, %62, %cst_23 [1] : vector<8x32xf32> to vector<8xf32>
    %68 = vector.shape_cast %67 : vector<8xf32> to vector<8x1xf32>
    %cst_24 = arith.constant 3.200000e+01 : f32
    %69 = vector.broadcast %cst_24 : f32 to vector<8x1xf32>
    %70 = arith.divf %68, %69 : vector<8x1xf32>
    %71 = vector.broadcast %70 : vector<8x1xf32> to vector<8x32xf32>
    %72 = arith.subf %62, %71 : vector<8x32xf32>
    %73 = vector.broadcast %70 : vector<8x1xf32> to vector<8x32xf32>
    %74 = arith.subf %62, %73 : vector<8x32xf32>
    %75 = arith.mulf %72, %74 : vector<8x32xf32>
    %cst_25 = arith.constant dense<0.000000e+00> : vector<8xf32>
    %76 = vector.multi_reduction <add>, %75, %cst_25 [1] : vector<8x32xf32> to vector<8xf32>
    %77 = vector.shape_cast %76 : vector<8xf32> to vector<8x1xf32>
    %cst_26 = arith.constant 3.200000e+01 : f32
    %78 = vector.broadcast %cst_26 : f32 to vector<8x1xf32>
    %79 = arith.divf %77, %78 : vector<8x1xf32>
    %80 = vector.broadcast %70 : vector<8x1xf32> to vector<8x32xf32>
    %81 = arith.subf %62, %80 : vector<8x32xf32>
    %cst_27 = arith.constant 9.99999974E-6 : f32
    %82 = vector.broadcast %cst_27 : f32 to vector<8x1xf32>
    %83 = arith.addf %79, %82 : vector<8x1xf32>
    %84 = math.rsqrt %83 : vector<8x1xf32>
    %85 = vector.broadcast %84 : vector<8x1xf32> to vector<8x32xf32>
    %86 = arith.mulf %81, %85 : vector<8x32xf32>
    %87 = vector.shape_cast %64 : vector<32xf32> to vector<1x32xf32>
    %88 = vector.broadcast %87 : vector<1x32xf32> to vector<8x32xf32>
    %89 = arith.mulf %86, %88 : vector<8x32xf32>
    %90 = vector.shape_cast %66 : vector<32xf32> to vector<1x32xf32>
    %91 = vector.broadcast %90 : vector<1x32xf32> to vector<8x32xf32>
    %92 = arith.addf %89, %91 : vector<8x32xf32>
    %93 = math.tanh %92 : vector<8x32xf32>
    %94 = arith.subf %3, %93 : vector<8x32xf32>
    %95 = arith.mulf %55, %94 : vector<8x32xf32>
    %96 = arith.addf %93, %95 : vector<8x32xf32>
    %c0_28 = arith.constant 0 : index
    %c0_29 = arith.constant 0 : index
    %97 = vector.load %arg10[%c0_28, %c0_29] : memref<8x32xf32, #tpu.memory_space<vmem>>, vector<8x32xf32>
    tpu.vector_store %arg10[%c0_28, %c0_29], %96 {strides = array<i32>} : memref<8x32xf32, #tpu.memory_space<vmem>>, vector<8x32xf32>,
    %c0_30 = arith.constant 0 : index
    %c0_31 = arith.constant 0 : index
    %c0_32 = arith.constant 0 : index
    %98 = vector.load %arg9[%c0_30, %c0_31, %c0_32] : memref<1x8x32xf32, #tpu.memory_space<vmem>>, vector<1x8x32xf32>
    %99 = vector.shape_cast %98 : vector<1x8x32xf32> to vector<8x32xf32>
    %100 = vector.shape_cast %96 : vector<8x32xf32> to vector<1x8x32xf32>
    tpu.vector_store %arg9[%c0_30, %c0_31, %c0_32], %100 {strides = array<i32>} : memref<1x8x32xf32, #tpu.memory_space<vmem>>, vector<1x8x32xf32>,
    return
  }
  func.func @transform_0(%arg0: i32, %arg1: i32) -> (i32, i32, i32) {
    %c0_i32 = arith.constant 0 : i32
    %c0_i32_0 = arith.constant 0 : i32
    return %arg1, %arg0, %c0_i32 : i32, i32, i32
  }
  func.func @transform_1(%arg0: i32, %arg1: i32) -> (i32, i32) {
    %c0_i32 = arith.constant 0 : i32
    %c0_i32_0 = arith.constant 0 : i32
    return %arg0, %c0_i32 : i32, i32
  }
  func.func @transform_2(%arg0: i32, %arg1: i32) -> (i32, i32) {
    %c0_i32 = arith.constant 0 : i32
    %c0_i32_0 = arith.constant 0 : i32
    %c0_i32_1 = arith.constant 0 : i32
    return %c0_i32, %c0_i32_0 : i32, i32
  }
  func.func @transform_3(%arg0: i32, %arg1: i32) -> (i32, i32) {
    %c0_i32 = arith.constant 0 : i32
    %c0_i32_0 = arith.constant 0 : i32
    %c0_i32_1 = arith.constant 0 : i32
    return %c0_i32, %c0_i32_0 : i32, i32
  }
  func.func @transform_4(%arg0: i32, %arg1: i32) -> (i32, i32) {
    %c0_i32 = arith.constant 0 : i32
    %c0_i32_0 = arith.constant 0 : i32
    %c0_i32_1 = arith.constant 0 : i32
    return %c0_i32, %c0_i32_0 : i32, i32
  }
  func.func @transform_5(%arg0: i32, %arg1: i32) -> (i32, i32) {
    %c0_i32 = arith.constant 0 : i32
    %c0_i32_0 = arith.constant 0 : i32
    %c0_i32_1 = arith.constant 0 : i32
    return %c0_i32, %c0_i32_0 : i32, i32
  }
  func.func @transform_6(%arg0: i32, %arg1: i32) -> (i32, i32) {
    %c0_i32 = arith.constant 0 : i32
    %c0_i32_0 = arith.constant 0 : i32
    %c0_i32_1 = arith.constant 0 : i32
    return %c0_i32, %c0_i32_0 : i32, i32
  }
  func.func @transform_7(%arg0: i32, %arg1: i32) -> (i32, i32, i32) {
    %c0_i32 = arith.constant 0 : i32
    %c0_i32_0 = arith.constant 0 : i32
    return %arg1, %arg0, %c0_i32 : i32, i32, i32
  }
}

</mosaic_0001>

<llo_original>
// kernel: tpu_custom_call.1
$region0: #{tpu_custom_call.1}
  #allocation0 [shape = 'u32[]', space=smem, size = 0x4, offset = 0x4, fixed_abs, tag = 'smem constant byte address 0x4 - core index']
  #allocation1 [shape = 'u32[144,128]{1,0:T(1,128)}', space=vmem, size = 0x12000, scoped, tag = 'internal scratch']
  #allocation2 [shape = 'f32[8,32]{1,0:T(8,128)}', space=vmem, size = 0x1000, scoped, tag = 'scratch operand']
  %s0 = inlined_call_operand.hbm [shape: f32[1,8,32], index: 0, kind: input, shape index: {}]
  %s1 = inlined_call_operand.hbm [shape: f32[8,32], index: 1, kind: input, shape index: {}]
  %s2 = inlined_call_operand.hbm [shape: f32[32,96], index: 2, kind: input, shape index: {}]
  %s3 = inlined_call_operand.hbm [shape: f32[32,64], index: 3, kind: input, shape index: {}]
  %s4 = inlined_call_operand.hbm [shape: f32[32,32], index: 4, kind: input, shape index: {}]
  %s5 = inlined_call_operand.vmem [shape: f32[3,32], index: 5, kind: input, shape index: {}]
  %s6 = inlined_call_operand.vmem [shape: f32[3,32], index: 6, kind: input, shape index: {}]
  %s7 = inlined_call_operand.hbm [shape: f32[1,8,32], index: 7, kind: output, shape index: {}]
  %s8 = sld [smem:[#allocation0]]
  $region62: #{tpu_custom_call.1} parent=0
    _
  %s10 = ssub.s32 1, %s8
  %s11 = scalar_select 0, %s10, %s8
  $region1: #{tpu_custom_call.1} parent=0
    #allocation3 [shape = 'u8[4096]{0}', space=vmem, size = 0x1000, scoped, tag = 'input window, operand 0, single buffered']
    #allocation4 [shape = 's32[1]{0}', space=sflag, size = 0x4, scoped, tag = 'scoped memory for tpu_custom_call.1']
    #allocation5 [shape = 's32[1]{0}', space=sflag, size = 0x4, scoped, tag = 'scoped memory for tpu_custom_call.1']
    #allocation6 [shape = 'u8[4096]{0}', space=vmem, size = 0x1000, scoped, tag = 'input window, operand 1, single buffered']
    #allocation7 [shape = 's32[1]{0}', space=sflag, size = 0x4, scoped, tag = 'scoped memory for tpu_custom_call.1']
    #allocation8 [shape = 'u8[16384]{0}', space=vmem, size = 0x4000, scoped, tag = 'input window, operand 2, single buffered']
    #allocation9 [shape = 'u8[16384]{0}', space=vmem, size = 0x4000, scoped, tag = 'input window, operand 3, single buffered']
    #allocation10 [shape = 's32[1]{0}', space=sflag, size = 0x4, scoped, tag = 'scoped memory for tpu_custom_call.1']
    #allocation11 [shape = 'u8[16384]{0}', space=vmem, size = 0x4000, scoped, tag = 'input window, operand 4, single buffered']
    #allocation12 [shape = 'u8[4096]{0}', space=vmem, size = 0x1000, scoped, tag = 'output window, operand 0, single buffered']
    %12 = vsyncpa [#allocation4], 0
    %13 = vsyncpa [#allocation7], 0
    %14 = vsyncpa [#allocation10], 0
    %15 = vsyncpa [#allocation5], 0
    // Predicated region
    $region2: #{tpu_custom_call.1} parent=1 // pred_check
      _
    $region3: #{tpu_custom_call.1} parent=1 // pred_check_branch
      %17 = sbr.rel (0) target = $region5
    $region4: #{tpu_custom_call.1} parent=1 // pred_region
      %s19 = ssub.s32 128, 128
      %20 = vsyncadd [#allocation4], %s19
      %s22 = sshll.u32 [#allocation3], 4
      %s23 = int_to_ptr.vmem [resolvable:$true] %s22
      %25 = dma.hbm_to_vmem [thread:$0]  %s0, 128, %s23, [#allocation4]
    $region5: #{tpu_custom_call.1} parent=1 // pred_fallthru
      _
    // Predicated region
    $region6: #{tpu_custom_call.1} parent=1 // pred_check
      _
    $region7: #{tpu_custom_call.1} parent=1 // pred_check_branch
      %27 = sbr.rel (0) target = $region9
    $region8: #{tpu_custom_call.1} parent=1 // pred_region
      %s29 = ssub.s32 128, 128
      %30 = vsyncadd [#allocation7], %s29
      %s32 = sshll.u32 [#allocation6], 4
      %s33 = int_to_ptr.vmem [resolvable:$true] %s32
      %35 = dma.hbm_to_vmem [thread:$0]  %s1, 128, %s33, [#allocation7]
    $region9: #{tpu_custom_call.1} parent=1 // pred_fallthru
      _
    // Predicated region
    $region10: #{tpu_custom_call.1} parent=1 // pred_check
      _
    $region11: #{tpu_custom_call.1} parent=1 // pred_check_branch
      %37 = sbr.rel (0) target = $region13
    $region12: #{tpu_custom_call.1} parent=1 // pred_region
      %s39 = ssub.s32 512, 512
      %40 = vsyncadd [#allocation7], %s39
      %s41 = sshll.u32 [#allocation8], 4
      %s42 = int_to_ptr.vmem [resolvable:$true] %s41
      %47 = dma.hbm_to_vmem [thread:$0]  %s2, 512, %s42, [#allocation7], 128, 128, 8
    $region13: #{tpu_custom_call.1} parent=1 // pred_fallthru
      _
    // Predicated region
    $region14: #{tpu_custom_call.1} parent=1 // pred_check
      _
    $region15: #{tpu_custom_call.1} parent=1 // pred_check_branch
      %49 = sbr.rel (0) target = $region17
    $region16: #{tpu_custom_call.1} parent=1 // pred_region
      %s51 = ssub.s32 512, 512
      %52 = vsyncadd [#allocation10], %s51
      %s53 = sshll.u32 [#allocation9], 4
      %s54 = int_to_ptr.vmem [resolvable:$true] %s53
      %59 = dma.hbm_to_vmem [thread:$0]  %s3, 512, %s54, [#allocation10], 128, 128, 8
    $region17: #{tpu_custom_call.1} parent=1 // pred_fallthru
      _
    // Predicated region
    $region18: #{tpu_custom_call.1} parent=1 // pred_check
      _
    $region19: #{tpu_custom_call.1} parent=1 // pred_check_branch
      %61 = sbr.rel (0) target = $region21
    $region20: #{tpu_custom_call.1} parent=1 // pred_region
      %s63 = ssub.s32 512, 512
      %64 = vsyncadd [#allocation10], %s63
      %s65 = sshll.u32 [#allocation11], 4
      %s66 = int_to_ptr.vmem [resolvable:$true] %s65
      %71 = dma.hbm_to_vmem [thread:$0]  %s4, 512, %s66, [#allocation10], 128, 128, 8
    $region21: #{tpu_custom_call.1} parent=1 // pred_fallthru
      _
    // Predicated region
    $region22: #{tpu_custom_call.1} parent=1 // pred_check
      _
    $region23: #{tpu_custom_call.1} parent=1 // pred_check_branch
      %73 = sbr.rel (0) target = $region25
    $region24: #{tpu_custom_call.1} parent=1 // pred_region
      _
    $region25: #{tpu_custom_call.1} parent=1 // pred_fallthru
      _
    // Predicated region
    $region26: #{tpu_custom_call.1} parent=1 // pred_check
      _
    $region27: #{tpu_custom_call.1} parent=1 // pred_check_branch
      %75 = sbr.rel (0) target = $region29
    $region28: #{tpu_custom_call.1} parent=1 // pred_region
      _
    $region29: #{tpu_custom_call.1} parent=1 // pred_fallthru
      _
    // Predicated region
    $region30: #{tpu_custom_call.1} parent=1 // pred_check
      _
    $region31: #{tpu_custom_call.1} parent=1 // pred_check_branch
      %77 = sbr.rel (0) target = $region33
    $region32: #{tpu_custom_call.1} parent=1 // pred_region
      %78 = dma.done [#allocation4], 128
    $region33: #{tpu_custom_call.1} parent=1 // pred_fallthru
      _
    // Predicated region
    $region34: #{tpu_custom_call.1} parent=1 // pred_check
      _
    $region35: #{tpu_custom_call.1} parent=1 // pred_check_branch
      %80 = sbr.rel (0) target = $region37
    $region36: #{tpu_custom_call.1} parent=1 // pred_region
      %81 = dma.done [#allocation7], 128
    $region37: #{tpu_custom_call.1} parent=1 // pred_fallthru
      _
    // Predicated region
    $region38: #{tpu_custom_call.1} parent=1 // pred_check
      _
    $region39: #{tpu_custom_call.1} parent=1 // pred_check_branch
      %83 = sbr.rel (0) target = $region41
    $region40: #{tpu_custom_call.1} parent=1 // pred_region
      %84 = dma.done [#allocation7], 512
    $region41: #{tpu_custom_call.1} parent=1 // pred_fallthru
      _
    // Predicated region
    $region42: #{tpu_custom_call.1} parent=1 // pred_check
      _
    $region43: #{tpu_custom_call.1} parent=1 // pred_check_branch
      %86 = sbr.rel (0) target = $region45
    $region44: #{tpu_custom_call.1} parent=1 // pred_region
      %87 = dma.done [#allocation10], 512
    $region45: #{tpu_custom_call.1} parent=1 // pred_fallthru
      _
    // Predicated region
    $region46: #{tpu_custom_call.1} parent=1 // pred_check
      _
    $region47: #{tpu_custom_call.1} parent=1 // pred_check_branch
      %89 = sbr.rel (0) target = $region49
    $region48: #{tpu_custom_call.1} parent=1 // pred_region
      %90 = dma.done [#allocation10], 512
    $region49: #{tpu_custom_call.1} parent=1 // pred_fallthru
      _
    %p91 = scmp.eq.s32.totalorder 0, 0
    // Predicated region
    $region50: #{tpu_custom_call.1} parent=1 // pred_check
      %p92 = pneg %p91
    $region51: #{tpu_custom_call.1} parent=1 // pred_check_branch
      %94 = sbr.rel (%p92) target = $region53
    $region52: #{tpu_custom_call.1} parent=1 // pred_region
      %v95 = vld [vmem:[#allocation6] sm:$0xff]
      %vm96 = vcmask 261120
      %97 = vst.msk [vmem:[#allocation2] sm:$0xff] %vm96, %v95
    $region53: #{tpu_custom_call.1} parent=1 // pred_fallthru
      _
    %v98 = vld [vmem:[#allocation2] sm:$0xff]
    %v99 = vld [vmem:[#allocation3] sm:$0xff]
    %v100 = vld [vmem:[#allocation8] sm:$0xff]
    %v101 = vld [vmem:[#allocation8 + $0x8] sm:$0xff]
    %v102 = vld [vmem:[#allocation8 + $0x10] sm:$0xff]
    %v103 = vld [vmem:[#allocation8 + $0x18] sm:$0xff]
    %vm104 = vcmask 261120
    %v106 = vsel %vm104, %v99, 0
    %108 = vmatprep.subr.mxu0 0.0
    %109 = vmatpush1.msra.mxu0 %v100
    %110 = vmatprep.subr.mxu0 0.0
    %111 = vmatpush1.msra.mxu0 %v101
    %112 = vmatprep.subr.mxu0 0.0
    %113 = vmatpush1.msra.mxu0 %v102
    %114 = vmatprep.subr.mxu0 0.0
    %115 = vmatpush1.msra.mxu0 %v103
    %116 = vmatprep.subr.mxu0 0.0
    %117 = vmatpush1.msra.mxu0 0.0
    %118 = vmatprep.subr.mxu0 0.0
    %119 = vmatpush1.msra.mxu0 0.0
    %120 = vmatprep.subr.mxu0 0.0
    %121 = vmatpush1.msra.mxu0 0.0
    %122 = vmatprep.subr.mxu0 0.0
    %123 = vmatpush1.msra.mxu0 0.0
    %124 = vmatprep.subr.mxu0 0.0
    %125 = vmatpush1.msra.mxu0 0.0
    %126 = vmatprep.subr.mxu0 0.0
    %127 = vmatpush1.msra.mxu0 0.0
    %128 = vmatprep.subr.mxu0 0.0
    %129 = vmatpush1.msra.mxu0 0.0
    %130 = vmatprep.subr.mxu0 0.0
    %131 = vmatpush1.msra.mxu0 0.0
    %132 = vmatprep.subr.mxu0 0.0
    %133 = vmatpush1.msra.mxu0 0.0
    %134 = vmatprep.subr.mxu0 0.0
    %135 = vmatpush1.msra.mxu0 0.0
    %136 = vmatprep.subr.mxu0 0.0
    %137 = vmatpush1.msra.mxu0 0.0
    %138 = vmatprep.subr.mxu0 0.0
    %139 = vmatpush1.msra.mxu0 0.0
    %140 = vmatprep.subr.mxu0 0.0
    %141 = vmatpush1.msra.mxu0 0.0
    %142 = vmatprep.subr.mxu0 0.0
    %143 = vmatpush1.msra.mxu0 0.0
    %144 = vmatprep.subr.mxu0 0.0
    %145 = vmatpush1.msra.mxu0 0.0
    %146 = vmatprep.subr.mxu0 0.0
    %147 = vmatpush1.msra.mxu0 0.0
    %148 = vmatprep.subr.mxu0 0.0
    %149 = vmatpush1.msra.mxu0 0.0
    %150 = vmatprep.subr.mxu0 0.0
    %151 = vmatpush1.msra.mxu0 0.0
    %152 = vmatprep.subr.mxu0 0.0
    %153 = vmatpush1.msra.mxu0 0.0
    %154 = vmatprep.subr.mxu0 0.0
    %155 = vmatpush1.msra.mxu0 0.0
    %156 = vmatprep.subr.mxu0 0.0
    %157 = vmatpush1.msra.mxu0 0.0
    %158 = vmatprep.subr.mxu0 0.0
    %159 = vmatpush1.msra.mxu0 0.0
    %160 = vmatprep.subr.mxu0 0.0
    %161 = vmatpush1.msra.mxu0 0.0
    %162 = vmatprep.subr.mxu0 0.0
    %163 = vmatpush1.msra.mxu0 0.0
    %164 = vmatprep.subr.mxu0 0.0
    %165 = vmatpush1.msra.mxu0 0.0
    %166 = vmatprep.subr.mxu0 0.0
    %167 = vmatpush1.msra.mxu0 0.0
    %168 = vmatprep.subr.mxu0 0.0
    %169 = vmatpush1.msra.mxu0 0.0
    %170 = vmatprep.subr.mxu0 0.0
    %171 = vmatpush1.msra.mxu0 0.0
    %172 = vmatprep.mubr.f32.mxu0 0.0
    %173 = vmatmul.mubr.f32.gmra.mrb[0].mxu0 %v106
    %v174 = vpop.f32.mrb[0].mxu0
    %v175 = vadd.f32 0.0, %v174
    %v176 = vpop.f32.mrb[0].mxu0
    %177 = vdwg.mxu0
    %v178 = vld [vmem:[#allocation9] sm:$0xff]
    %v179 = vld [vmem:[#allocation9 + $0x8] sm:$0xff]
    %v180 = vld [vmem:[#allocation9 + $0x10] sm:$0xff]
    %v181 = vld [vmem:[#allocation9 + $0x18] sm:$0xff]
    %v183 = vsel %vm104, %v98, 0
    %185 = vmatprep.subr.mxu0 0.0
    %186 = vmatpush1.msra.mxu0 %v178
    %187 = vmatprep.subr.mxu0 0.0
    %188 = vmatpush1.msra.mxu0 %v179
    %189 = vmatprep.subr.mxu0 0.0
    %190 = vmatpush1.msra.mxu0 %v180
    %191 = vmatprep.subr.mxu0 0.0
    %192 = vmatpush1.msra.mxu0 %v181
    %193 = vmatprep.subr.mxu0 0.0
    %194 = vmatpush1.msra.mxu0 0.0
    %195 = vmatprep.subr.mxu0 0.0
    %196 = vmatpush1.msra.mxu0 0.0
    %197 = vmatprep.subr.mxu0 0.0
    %198 = vmatpush1.msra.mxu0 0.0
    %199 = vmatprep.subr.mxu0 0.0
    %200 = vmatpush1.msra.mxu0 0.0
    %201 = vmatprep.subr.mxu0 0.0
    %202 = vmatpush1.msra.mxu0 0.0
    %203 = vmatprep.subr.mxu0 0.0
    %204 = vmatpush1.msra.mxu0 0.0
    %205 = vmatprep.subr.mxu0 0.0
    %206 = vmatpush1.msra.mxu0 0.0
    %207 = vmatprep.subr.mxu0 0.0
    %208 = vmatpush1.msra.mxu0 0.0
    %209 = vmatprep.subr.mxu0 0.0
    %210 = vmatpush1.msra.mxu0 0.0
    %211 = vmatprep.subr.mxu0 0.0
    %212 = vmatpush1.msra.mxu0 0.0
    %213 = vmatprep.subr.mxu0 0.0
    %214 = vmatpush1.msra.mxu0 0.0
    %215 = vmatprep.subr.mxu0 0.0
    %216 = vmatpush1.msra.mxu0 0.0
    %217 = vmatprep.subr.mxu0 0.0
    %218 = vmatpush1.msra.mxu0 0.0
    %219 = vmatprep.subr.mxu0 0.0
    %220 = vmatpush1.msra.mxu0 0.0
    %221 = vmatprep.subr.mxu0 0.0
    %222 = vmatpush1.msra.mxu0 0.0
    %223 = vmatprep.subr.mxu0 0.0
    %224 = vmatpush1.msra.mxu0 0.0
    %225 = vmatprep.subr.mxu0 0.0
    %226 = vmatpush1.msra.mxu0 0.0
    %227 = vmatprep.subr.mxu0 0.0
    %228 = vmatpush1.msra.mxu0 0.0
    %229 = vmatprep.subr.mxu0 0.0
    %230 = vmatpush1.msra.mxu0 0.0
    %231 = vmatprep.subr.mxu0 0.0
    %232 = vmatpush1.msra.mxu0 0.0
    %233 = vmatprep.subr.mxu0 0.0
    %234 = vmatpush1.msra.mxu0 0.0
    %235 = vmatprep.subr.mxu0 0.0
    %236 = vmatpush1.msra.mxu0 0.0
    %237 = vmatprep.subr.mxu0 0.0
    %238 = vmatpush1.msra.mxu0 0.0
    %239 = vmatprep.subr.mxu0 0.0
    %240 = vmatpush1.msra.mxu0 0.0
    %241 = vmatprep.subr.mxu0 0.0
    %242 = vmatpush1.msra.mxu0 0.0
    %243 = vmatprep.subr.mxu0 0.0
    %244 = vmatpush1.msra.mxu0 0.0
    %245 = vmatprep.subr.mxu0 0.0
    %246 = vmatpush1.msra.mxu0 0.0
    %247 = vmatprep.subr.mxu0 0.0
    %248 = vmatpush1.msra.mxu0 0.0
    %249 = vmatprep.mubr.f32.mxu0 0.0
    %250 = vmatmul.mubr.f32.gmra.mrb[0].mxu0 %v183
    %v251 = vpop.f32.mrb[0].mxu0
    %v252 = vadd.f32 0.0, %v251
    %v253 = vpop.f32.mrb[0].mxu0
    %254 = vdwg.mxu0
    %v255 = vld [vmem:[%s5] sm:$0x7]
    %v256 = vld [vmem:[%s6] sm:$0x7]
    %v257 = vadd.f32 %v175, %v252
    %259 = vrot.lane.b32.xlu0 %v257, 96
    %v260 = vpop.permute.xlu0 %259
    %v264 = vunpack.c.l.s4 1966171168
    %v265 = vunpack.c.0.s8 %v264
    %v266 = vlaneseq
    %v267 = vshrl.u32 %v266, 7
    %v268 = vsub.s32 %v265, %v267
    %v269 = vrot.slane %v255, %v268
    %v270 = vcombine.high %v269, %v269
    %v272 = vunpack.c.l.s4 1966171168
    %v273 = vunpack.c.0.s8 %v272
    %v274 = vlaneseq
    %v275 = vshrl.u32 %v274, 7
    %v276 = vsub.s32 %v273, %v275
    %v277 = vrot.slane %v269, %v276
    %v279 = vunpack.c.l.s4 1966171168
    %v280 = vunpack.c.0.s8 %v279
    %v281 = vlaneseq
    %v282 = vshrl.u32 %v281, 7
    %v283 = vsub.s32 %v280, %v282
    %v284 = vrot.slane %v270, %v283
    %v287 = vunpack.c.l.s4 1966171168
    %v288 = vunpack.c.0.s8 %v287
    %v289 = vlaneseq
    %v290 = vshrl.u32 %v289, 7
    %v291 = vsub.s32 %v288, %v290
    %v292 = vrot.slane %v256, %v291
    %v293 = vcombine.high %v292, %v292
    %v295 = vunpack.c.l.s4 1966171168
    %v296 = vunpack.c.0.s8 %v295
    %v297 = vlaneseq
    %v298 = vshrl.u32 %v297, 7
    %v299 = vsub.s32 %v296, %v298
    %v300 = vrot.slane %v292, %v299
    %v302 = vunpack.c.l.s4 1966171168
    %v303 = vunpack.c.0.s8 %v302
    %v304 = vlaneseq
    %v305 = vshrl.u32 %v304, 7
    %v306 = vsub.s32 %v303, %v305
    %v307 = vrot.slane %v293, %v306
    %v308 = vsel %vm104, %v257, 0.0
    %309 = vadd.xlane.f32.xlu0 %v308
    %v310 = vpop.xlane.xlu0 %309
    %v311 = vsel %vm104, %v260, 0.0
    %312 = vadd.xlane.f32.xlu0 %v311
    %v313 = vpop.xlane.xlu0 %312
    %v314 = vrcp.pop 32.0
    %v315 = vmul.f32 %v310, %v314
    %v316 = vmul.f32 %v313, %v314
    %v317 = vsub.f32 %v257, %v315
    %v318 = vsub.f32 %v260, %v316
    %v319 = vmul.f32 %v317, %v317
    %v320 = vmul.f32 %v318, %v318
    %v321 = vsel %vm104, %v319, 0.0
    %322 = vadd.xlane.f32.xlu0 %v321
    %v323 = vpop.xlane.xlu0 %322
    %v324 = vsel %vm104, %v320, 0.0
    %325 = vadd.xlane.f32.xlu0 %v324
    %v326 = vpop.xlane.xlu0 %325
    %v327 = vmul.f32 %v323, %v314
    %v328 = vmul.f32 %v326, %v314
    %v329 = vadd.f32 %v327, 1e-05
    %v330 = vadd.f32 %v328, 1e-05
    %v331 = vrsqrt.pop %v329
    %v332 = vrsqrt.pop %v330
    %v333 = vmul.f32 %v317, %v331
    %v334 = vmul.f32 %v318, %v332
    %v335 = vlaneseq
    %v336 = vshrl.u32 %v335, 7
    %v337 = vsub.s32 0, %v336
    %v338 = vrot.slane %v277, %v337
    %v339 = vlaneseq
    %v340 = vshrl.u32 %v339, 7
    %v341 = vsub.s32 0, %v340
    %v342 = vrot.slane %v284, %v341
    %v345 = vmul.f32 %v333, %v338
    %v346 = vmul.f32 %v334, %v342
    %v347 = vlaneseq
    %v348 = vshrl.u32 %v347, 7
    %v349 = vsub.s32 0, %v348
    %v350 = vrot.slane %v300, %v349
    %v351 = vlaneseq
    %v352 = vshrl.u32 %v351, 7
    %v353 = vsub.s32 0, %v352
    %v354 = vrot.slane %v307, %v353
    %v357 = vadd.f32 %v345, %v350
    %v358 = vadd.f32 %v346, %v354
    %v359 = vxor.u32 %v357, 2147483648
    %v360 = vxor.u32 %v358, 2147483648
    %v361 = vmul.f32 %v359, 1.442695
    %v362 = vpow.pop %v361
    %v363 = vmul.f32 %v360, 1.442695
    %v364 = vpow.pop %v363
    %v365 = vadd.f32 %v362, 1.0
    %v366 = vadd.f32 %v364, 1.0
    %v367 = vrcp.pop %v365
    %v368 = vmul.f32 1.0, %v367
    %v369 = vrcp.pop %v366
    %v370 = vmul.f32 1.0, %v369
    %v371 = vmul.f32 %v370, %v98
    %v372 = vld [vmem:[#allocation11] sm:$0xff]
    %v373 = vld [vmem:[#allocation11 + $0x8] sm:$0xff]
    %v374 = vld [vmem:[#allocation11 + $0x10] sm:$0xff]
    %v375 = vld [vmem:[#allocation11 + $0x18] sm:$0xff]
    %v377 = vsel %vm104, %v371, 0
    %379 = vmatprep.subr.mxu0 0.0
    %380 = vmatpush1.msra.mxu0 %v372
    %381 = vmatprep.subr.mxu0 0.0
    %382 = vmatpush1.msra.mxu0 %v373
    %383 = vmatprep.subr.mxu0 0.0
    %384 = vmatpush1.msra.mxu0 %v374
    %385 = vmatprep.subr.mxu0 0.0
    %386 = vmatpush1.msra.mxu0 %v375
    %387 = vmatprep.subr.mxu0 0.0
    %388 = vmatpush1.msra.mxu0 0.0
    %389 = vmatprep.subr.mxu0 0.0
    %390 = vmatpush1.msra.mxu0 0.0
    %391 = vmatprep.subr.mxu0 0.0
    %392 = vmatpush1.msra.mxu0 0.0
    %393 = vmatprep.subr.mxu0 0.0
    %394 = vmatpush1.msra.mxu0 0.0
    %395 = vmatprep.subr.mxu0 0.0
    %396 = vmatpush1.msra.mxu0 0.0
    %397 = vmatprep.subr.mxu0 0.0
    %398 = vmatpush1.msra.mxu0 0.0
    %399 = vmatprep.subr.mxu0 0.0
    %400 = vmatpush1.msra.mxu0 0.0
    %401 = vmatprep.subr.mxu0 0.0
    %402 = vmatpush1.msra.mxu0 0.0
    %403 = vmatprep.subr.mxu0 0.0
    %404 = vmatpush1.msra.mxu0 0.0
    %405 = vmatprep.subr.mxu0 0.0
    %406 = vmatpush1.msra.mxu0 0.0
    %407 = vmatprep.subr.mxu0 0.0
    %408 = vmatpush1.msra.mxu0 0.0
    %409 = vmatprep.subr.mxu0 0.0
    %410 = vmatpush1.msra.mxu0 0.0
    %411 = vmatprep.subr.mxu0 0.0
    %412 = vmatpush1.msra.mxu0 0.0
    %413 = vmatprep.subr.mxu0 0.0
    %414 = vmatpush1.msra.mxu0 0.0
    %415 = vmatprep.subr.mxu0 0.0
    %416 = vmatpush1.msra.mxu0 0.0
    %417 = vmatprep.subr.mxu0 0.0
    %418 = vmatpush1.msra.mxu0 0.0
    %419 = vmatprep.subr.mxu0 0.0
    %420 = vmatpush1.msra.mxu0 0.0
    %421 = vmatprep.subr.mxu0 0.0
    %422 = vmatpush1.msra.mxu0 0.0
    %423 = vmatprep.subr.mxu0 0.0
    %424 = vmatpush1.msra.mxu0 0.0
    %425 = vmatprep.subr.mxu0 0.0
    %426 = vmatpush1.msra.mxu0 0.0
    %427 = vmatprep.subr.mxu0 0.0
    %428 = vmatpush1.msra.mxu0 0.0
    %429 = vmatprep.subr.mxu0 0.0
    %430 = vmatpush1.msra.mxu0 0.0
    %431 = vmatprep.subr.mxu0 0.0
    %432 = vmatpush1.msra.mxu0 0.0
    %433 = vmatprep.subr.mxu0 0.0
    %434 = vmatpush1.msra.mxu0 0.0
    %435 = vmatprep.subr.mxu0 0.0
    %436 = vmatpush1.msra.mxu0 0.0
    %437 = vmatprep.subr.mxu0 0.0
    %438 = vmatpush1.msra.mxu0 0.0
    %439 = vmatprep.subr.mxu0 0.0
    %440 = vmatpush1.msra.mxu0 0.0
    %441 = vmatprep.subr.mxu0 0.0
    %442 = vmatpush1.msra.mxu0 0.0
    %443 = vmatprep.mubr.f32.mxu0 0.0
    %444 = vmatmul.mubr.f32.gmra.mrb[0].mxu0 %v377
    %v445 = vpop.f32.mrb[0].mxu0
    %v446 = vadd.f32 0.0, %v445
    %v447 = vpop.f32.mrb[0].mxu0
    %448 = vdwg.mxu0
    %450 = vrot.lane.b32.xlu0 %v446, 64
    %v451 = vpop.permute.xlu0 %450
    %v453 = vadd.f32 %v175, %v451
    %455 = vrot.lane.b32.xlu0 %v453, 64
    %v456 = vpop.permute.xlu0 %455
    %v458 = vsel %vm104, %v456, 0.0
    %459 = vadd.xlane.f32.xlu0 %v458
    %v460 = vpop.xlane.xlu0 %459
    %v461 = vmul.f32 %v460, %v314
    %v462 = vsub.f32 %v453, %v461
    %v463 = vmul.f32 %v462, %v462
    %465 = vrot.lane.b32.xlu0 %v463, 64
    %v466 = vpop.permute.xlu0 %465
    %v468 = vsel %vm104, %v466, 0.0
    %469 = vadd.xlane.f32.xlu0 %v468
    %v470 = vpop.xlane.xlu0 %469
    %v471 = vmul.f32 %v470, %v314
    %v472 = vadd.f32 %v471, 1e-05
    %v473 = vrsqrt.pop %v472
    %v474 = vmul.f32 %v462, %v473
    %v475 = vlaneseq
    %v476 = vshrl.u32 %v475, 7
    %v477 = vsub.s32 2, %v476
    %v478 = vrot.slane %v255, %v477
    %480 = vrot.lane.b32.xlu0 %v478, 64
    %v481 = vpop.permute.xlu0 %480
    %v483 = vmul.f32 %v474, %v481
    %v484 = vlaneseq
    %v485 = vshrl.u32 %v484, 7
    %v486 = vsub.s32 2, %v485
    %v487 = vrot.slane %v256, %v486
    %489 = vrot.lane.b32.xlu0 %v487, 64
    %v490 = vpop.permute.xlu0 %489
    %v492 = vadd.f32 %v483, %v490
    %v493 = vtanh.pop %v492
    %495 = vrot.lane.b32.xlu0 %v493, 64
    %v496 = vpop.permute.xlu0 %495
    %v498 = vsub.f32 %v98, %v496
    %v499 = vmul.f32 %v368, %v498
    %501 = vrot.lane.b32.xlu0 %v499, 64
    %v502 = vpop.permute.xlu0 %501
    %v504 = vadd.f32 %v493, %v502
    %506 = vrot.lane.b32.xlu0 %v504, 64
    %v507 = vpop.permute.xlu0 %506
    %509 = vst.msk [vmem:[#allocation2] sm:$0xff] %vm104, %v507
    %510 = vst.msk [vmem:[#allocation12] sm:$0xff] %vm104, %v507
    // Predicated region
    $region54: #{tpu_custom_call.1} parent=1 // pred_check
      _
    $region55: #{tpu_custom_call.1} parent=1 // pred_check_branch
      %512 = sbr.rel (0) target = $region57
    $region56: #{tpu_custom_call.1} parent=1 // pred_region
      %s514 = ssub.s32 128, 128
      %515 = vsyncadd [#allocation5], %s514
      %s517 = sshll.u32 [#allocation12], 4
      %s518 = int_to_ptr.vmem [resolvable:$true] %s517
      %520 = dma.vmem_to_hbm [thread:$0]  %s518, 128, %s7, [#allocation5]
    $region57: #{tpu_custom_call.1} parent=1 // pred_fallthru
      _
    // Predicated region
    $region58: #{tpu_custom_call.1} parent=1 // pred_check
      _
    $region59: #{tpu_custom_call.1} parent=1 // pred_check_branch
      %522 = sbr.rel (0) target = $region61
    $region60: #{tpu_custom_call.1} parent=1 // pred_region
      %523 = dma.done [#allocation5], 128
    $region61: #{tpu_custom_call.1} parent=1 // pred_fallthru
      _
    %524 = vsyncpa [#allocation4], 1
    %525 = vsyncpa [#allocation7], 1
    %526 = vsyncpa [#allocation10], 1
    %527 = vsyncpa [#allocation5], 1

</llo_original>
